<compile_context>
chip_gen: v6e
topology: v6e:2x2x1
jax: 0.10.0
libtpu: 0.0.40
codegen_flags: <defaults>
</compile_context>

<pallas_src>
import functools

import jax
import jax.numpy as jnp
from jax.experimental import pallas as pl
from jax.experimental.pallas import tpu as pltpu

OUT_LANES = 8  # small lane-padded output block; real logits live in [:, :2]


def _round_up(x, m):
    return ((x + m - 1) // m) * m


def _fused_kernel(
    x1_ref, x2_ref,
    w1a_ref, w1b_ref, b1_ref,   # AttentionFusion.linear1, split for x1 / x2 halves
    wa_ref, ba_ref,             # AttentionFusion.attention as (1, F) row + scalar
    wf1_ref, bf1_ref,           # f1
    wf2_ref, bf2_ref,           # f2
    wf3_ref, bf3_ref,           # f3 (F, OUT_LANES)
    out_ref,
):
    x1 = x1_ref[...]                                   # (TB, F) f32
    x2 = x2_ref[...]

    # linear1(cat([x1, x2])): two MXU dots (same total K), f32 accumulation.
    h = (jnp.dot(x1.astype(jnp.bfloat16), w1a_ref[...],
                 preferred_element_type=jnp.float32)
         + jnp.dot(x2.astype(jnp.bfloat16), w1b_ref[...],
                   preferred_element_type=jnp.float32)
         + b1_ref[...])
    h = jnp.maximum(h, 0.0)                            # ReLU

    # attention score: VPU/XLU reduction instead of an N=1 matmul.
    scores = jnp.sum(h * wa_ref[...], axis=-1, keepdims=True) + ba_ref[...]
    gate = pl.reciprocal(1.0 + jnp.exp(-scores), approx=True)   # sigmoid (EUP)

    # gated fusion: g*x1 + (1-g)*x2 == x2 + g*(x1 - x2)  (one fewer multiply).
    fused = x2 + gate * (x1 - x2)

    # f1 -> dropout (eval: identity) -> relu
    y = jnp.dot(fused.astype(jnp.bfloat16), wf1_ref[...],
                preferred_element_type=jnp.float32) + bf1_ref[...]
    y = jnp.maximum(y, 0.0)

    # f2 -> relu
    y = jnp.dot(y.astype(jnp.bfloat16), wf2_ref[...],
                preferred_element_type=jnp.float32) + bf2_ref[...]
    y = jnp.maximum(y, 0.0)

    # f3 -> (TB, OUT_LANES) block; real logits in cols [0, 2).
    out_ref[...] = (
        jnp.dot(y.astype(jnp.bfloat16), wf3_ref[...],
                preferred_element_type=jnp.float32) + bf3_ref[...]
    ).astype(out_ref.dtype)


def pack_params(params, f_real):
    """One-time repack: PyTorch (out,in) -> (in,out); K dims stay at real F,
    only the f3 output (lane) dim is padded; matmul weights cast to bf16."""
    F = f_real
    w1 = params["fusion_linear1_w"]                           # (F, 2F)
    wf3_t = jnp.pad(jnp.transpose(params["f3_w"]), ((0, 0), (0, OUT_LANES - 2)))

    packed = {
        "w1a": jnp.transpose(w1[:, :F]).astype(jnp.bfloat16),     # (F, F)
        "w1b": jnp.transpose(w1[:, F:]).astype(jnp.bfloat16),     # (F, F)
        "b1": params["fusion_linear1_b"].reshape(1, F).astype(jnp.float32),
        "wa": params["fusion_attn_w"].reshape(1, F).astype(jnp.float32),
        "ba": params["fusion_attn_b"].reshape(1, 1).astype(jnp.float32),
        "wf1": jnp.transpose(params["f1_w"]).astype(jnp.bfloat16),
        "bf1": params["f1_b"].reshape(1, F).astype(jnp.float32),
        "wf2": jnp.transpose(params["f2_w"]).astype(jnp.bfloat16),
        "bf2": params["f2_b"].reshape(1, F).astype(jnp.float32),
        "wf3": wf3_t.astype(jnp.bfloat16),                        # (F, OUT_LANES)
        "bf3": jnp.pad(params["f3_b"], (0, OUT_LANES - 2)).reshape(1, OUT_LANES)
               .astype(jnp.float32),
    }
    return packed


@jax.jit
def multimodal_transformer_head(gnn_x, tabular_x, packed):
    """Fused AttentionFusion + MLP head in one batch-gridded Pallas kernel."""
    B, F = gnn_x.shape

    # Batch tiling: sublane-aligned, large tiles (amortize ~0.35us/step and MXU
    # fill/drain), but keep >= 2 tiles when possible so the "parallel" axis can
    # shard across v7x's two TensorCores.
    B_sub = _round_up(max(B, 8), 8)
    if B_sub >= 1024:
        TB = 512
    elif B_sub > 8:
        TB = _round_up(B_sub // 2, 8)
    else:
        TB = B_sub
    B_pad = _round_up(B_sub, TB)
    nb = B_pad // TB

    # Batch-row padding only (no feature padding in HBM); no-op when B == B_pad.
    if B_pad != B:
        x1 = jnp.pad(gnn_x, ((0, B_pad - B), (0, 0)))
        x2 = jnp.pad(tabular_x, ((0, B_pad - B), (0, 0)))
    else:
        x1, x2 = gnn_x, tabular_x

    act_spec = pl.BlockSpec((TB, F), lambda i: (i, 0))
    out_spec = pl.BlockSpec((TB, OUT_LANES), lambda i: (i, 0))

    def resident(a):  # weight / bias stays in VMEM across all batch tiles
        return pl.BlockSpec(a.shape, lambda i: (0,) * a.ndim)

    weights = (packed["w1a"], packed["w1b"], packed["b1"],
               packed["wa"], packed["ba"],
               packed["wf1"], packed["bf1"],
               packed["wf2"], packed["bf2"],
               packed["wf3"], packed["bf3"])

    # Cost estimate reflecting what is actually moved / computed.
    flops = int(B_pad) * (4 * F * F          # linear1 (two dots, K=F each)
                          + 2 * F * F        # f1
                          + 2 * F * F        # f2
                          + 2 * F * OUT_LANES  # f3
                          + 10 * F)          # attention reduce + gate mix + relus
    weight_bytes = (4 * F * F + F * OUT_LANES) * 2 \
        + (4 * F + 1 + OUT_LANES) * 4
    bytes_accessed = weight_bytes + 2 * int(B_pad) * F * 4 \
        + int(B_pad) * OUT_LANES * 4

    out = pl.pallas_call(
        _fused_kernel,
        out_shape=jax.ShapeDtypeStruct((B_pad, OUT_LANES), jnp.float32),
        grid=(nb,),
        in_specs=[act_spec, act_spec] + [resident(w) for w in weights],
        out_specs=out_spec,
        compiler_params=pltpu.CompilerParams(
            dimension_semantics=("parallel",)),
        cost_estimate=pl.CostEstimate(
            flops=flops, transcendentals=2 * int(B_pad),
            bytes_accessed=bytes_accessed),
    )(x1, x2, *weights)

    return out[:B, :2]


def init_params(key, f1):
    """PyTorch-layout parameters (nn.Linear default init)."""
    ks = jax.random.split(key, 10)

    def lin(kw, kb, out_dim, in_dim):
        bound = 1.0 / jnp.sqrt(in_dim)
        w = jax.random.uniform(kw, (out_dim, in_dim), jnp.float32, -bound, bound)
        b = jax.random.uniform(kb, (out_dim,), jnp.float32, -bound, bound)
        return w, b

    p = {}
    p["fusion_linear1_w"], p["fusion_linear1_b"] = lin(ks[0], ks[1], f1, 2 * f1)
    p["fusion_attn_w"], p["fusion_attn_b"] = lin(ks[2], ks[3], 1, f1)
    p["f1_w"], p["f1_b"] = lin(ks[4], ks[5], f1, f1)
    p["f2_w"], p["f2_b"] = lin(ks[6], ks[7], f1, f1)
    p["f3_w"], p["f3_b"] = lin(ks[8], ks[9], 2, f1)
    return p


def _reference(gnn_x, tabular_x, p):
    """Pure-JAX f32 reference of the PyTorch forward (dropout = eval identity)."""
    comb = jnp.concatenate([gnn_x, tabular_x], axis=1)
    h = jnp.maximum(comb @ p["fusion_linear1_w"].T + p["fusion_linear1_b"], 0.0)
    s = h @ p["fusion_attn_w"].T + p["fusion_attn_b"]
    g = jax.nn.sigmoid(s)
    fused = g * gnn_x + (1.0 - g) * tabular_x
    y = jnp.maximum(fused @ p["f1_w"].T + p["f1_b"], 0.0)
    y = jnp.maximum(y @ p["f2_w"].T + p["f2_b"], 0.0)
    return y @ p["f3_w"].T + p["f3_b"]


if __name__ == "__main__":
    B, F = 8, 32
    key = jax.random.PRNGKey(0)
    k_gnn, k_tab, k_params = jax.random.split(key, 3)

    gnn_x = jax.random.normal(k_gnn, (B, F), dtype=jnp.float32)
    tabular_x = jax.random.normal(k_tab, (B, F), dtype=jnp.float32)

    params = init_params(k_params, F)
    packed = pack_params(params, F)          # one-time repack (bf16 weights)
    packed = jax.tree_util.tree_map(jax.block_until_ready, packed)

    out = multimodal_transformer_head(gnn_x, tabular_x, packed)
    out = jax.block_until_ready(out)
    assert out.shape == (B, 2) and out.dtype == jnp.float32
    assert bool(jnp.all(jnp.isfinite(out)))

    # Loose parity check vs f32 reference (bf16 weights + approx sigmoid recip).
    ref = _reference(gnn_x, tabular_x, params)
    max_err = float(jnp.max(jnp.abs(out - ref)))
    assert max_err < 1e-1, f"max abs err vs reference too large: {max_err}"

    print("KERNEL_OK")
</pallas_src>

<mosaic_0001>
module attributes {stable_mosaic.version = 11 : i64} {
  func.func @_fused_kernel(%arg0: i32, %arg1: memref<8x32xf32, #tpu.memory_space<vmem>>, %arg2: memref<8x32xf32, #tpu.memory_space<vmem>>, %arg3: memref<32x32xbf16, #tpu.memory_space<vmem>>, %arg4: memref<32x32xbf16, #tpu.memory_space<vmem>>, %arg5: memref<1x32xf32, #tpu.memory_space<vmem>>, %arg6: memref<1x32xf32, #tpu.memory_space<vmem>>, %arg7: memref<1x1xf32, #tpu.memory_space<vmem>>, %arg8: memref<32x32xbf16, #tpu.memory_space<vmem>>, %arg9: memref<1x32xf32, #tpu.memory_space<vmem>>, %arg10: memref<32x32xbf16, #tpu.memory_space<vmem>>, %arg11: memref<1x32xf32, #tpu.memory_space<vmem>>, %arg12: memref<32x8xbf16, #tpu.memory_space<vmem>>, %arg13: memref<1x8xf32, #tpu.memory_space<vmem>>, %arg14: memref<8x8xf32, #tpu.memory_space<vmem>>) attributes {dimension_semantics = [#tpu.dimension_semantics<parallel>], iteration_bounds = array<i64: 1>, scalar_prefetch = 0 : i64, scratch_operands = 0 : i64, tpu.core_type = #tpu.core_type<tc>, window_params = [{transform_indices = @transform_0, window_bounds = array<i64: 8, 32>}, {transform_indices = @transform_1, window_bounds = array<i64: 8, 32>}, {pipeline_mode = #tpu.pipeline_mode<synchronous>, transform_indices = @transform_2, window_bounds = array<i64: 32, 32>}, {pipeline_mode = #tpu.pipeline_mode<synchronous>, transform_indices = @transform_3, window_bounds = array<i64: 32, 32>}, {pipeline_mode = #tpu.pipeline_mode<synchronous>, transform_indices = @transform_4, window_bounds = array<i64: 1, 32>}, {pipeline_mode = #tpu.pipeline_mode<synchronous>, transform_indices = @transform_5, window_bounds = array<i64: 1, 32>}, {pipeline_mode = #tpu.pipeline_mode<synchronous>, transform_indices = @transform_6, window_bounds = array<i64: 1, 1>}, {pipeline_mode = #tpu.pipeline_mode<synchronous>, transform_indices = @transform_7, window_bounds = array<i64: 32, 32>}, {pipeline_mode = #tpu.pipeline_mode<synchronous>, transform_indices = @transform_8, window_bounds = array<i64: 1, 32>}, {pipeline_mode = #tpu.pipeline_mode<synchronous>, transform_indices = @transform_9, window_bounds = array<i64: 32, 32>}, {pipeline_mode = #tpu.pipeline_mode<synchronous>, transform_indices = @transform_10, window_bounds = array<i64: 1, 32>}, {pipeline_mode = #tpu.pipeline_mode<synchronous>, transform_indices = @transform_11, window_bounds = array<i64: 32, 8>}, {pipeline_mode = #tpu.pipeline_mode<synchronous>, transform_indices = @transform_12, window_bounds = array<i64: 1, 8>}, {transform_indices = @transform_13, window_bounds = array<i64: 8, 8>}]} {
    %c0 = arith.constant 0 : index
    %c0_0 = arith.constant 0 : index
    %0 = vector.load %arg1[%c0, %c0_0] : memref<8x32xf32, #tpu.memory_space<vmem>>, vector<8x32xf32>
    %c0_1 = arith.constant 0 : index
    %c0_2 = arith.constant 0 : index
    %1 = vector.load %arg2[%c0_1, %c0_2] : memref<8x32xf32, #tpu.memory_space<vmem>>, vector<8x32xf32>
    %2 = arith.truncf %0 : vector<8x32xf32> to vector<8x32xbf16>
    %c0_3 = arith.constant 0 : index
    %c0_4 = arith.constant 0 : index
    %3 = vector.load %arg3[%c0_3, %c0_4] : memref<32x32xbf16, #tpu.memory_space<vmem>>, vector<32x32xbf16>
    %cst = arith.constant dense<0.000000e+00> : vector<8x32xf32>
    %4 = tpu.matmul %2, %3, %cst {dimension_numbers = #tpu.dot_dimension_numbers<[1], [0], [0], [1], [0, 0, 1, 1], [], []>} : vector<8x32xbf16>, vector<32x32xbf16>, vector<8x32xf32> -> vector<8x32xf32>
    %5 = arith.truncf %1 : vector<8x32xf32> to vector<8x32xbf16>
    %c0_5 = arith.constant 0 : index
    %c0_6 = arith.constant 0 : index
    %6 = vector.load %arg4[%c0_5, %c0_6] : memref<32x32xbf16, #tpu.memory_space<vmem>>, vector<32x32xbf16>
    %cst_7 = arith.constant dense<0.000000e+00> : vector<8x32xf32>
    %7 = tpu.matmul %5, %6, %cst_7 {dimension_numbers = #tpu.dot_dimension_numbers<[1], [0], [0], [1], [0, 0, 1, 1], [], []>} : vector<8x32xbf16>, vector<32x32xbf16>, vector<8x32xf32> -> vector<8x32xf32>
    %8 = arith.addf %4, %7 : vector<8x32xf32>
    %c0_8 = arith.constant 0 : index
    %c0_9 = arith.constant 0 : index
    %9 = vector.load %arg5[%c0_8, %c0_9] : memref<1x32xf32, #tpu.memory_space<vmem>>, vector<1x32xf32>
    %10 = vector.broadcast %9 : vector<1x32xf32> to vector<8x32xf32>
    %11 = arith.addf %8, %10 : vector<8x32xf32>
    %cst_10 = arith.constant 0.000000e+00 : f32
    %12 = vector.broadcast %cst_10 : f32 to vector<8x32xf32>
    %13 = arith.maximumf %11, %12 : vector<8x32xf32>
    %c0_11 = arith.constant 0 : index
    %c0_12 = arith.constant 0 : index
    %14 = vector.load %arg6[%c0_11, %c0_12] : memref<1x32xf32, #tpu.memory_space<vmem>>, vector<1x32xf32>
    %15 = vector.broadcast %14 : vector<1x32xf32> to vector<8x32xf32>
    %16 = arith.mulf %13, %15 : vector<8x32xf32>
    %cst_13 = arith.constant dense<0.000000e+00> : vector<8xf32>
    %17 = vector.multi_reduction <add>, %16, %cst_13 [1] : vector<8x32xf32> to vector<8xf32>
    %18 = vector.shape_cast %17 : vector<8xf32> to vector<8x1xf32>
    %c0_14 = arith.constant 0 : index
    %c0_15 = arith.constant 0 : index
    %19 = vector.load %arg7[%c0_14, %c0_15] : memref<1x1xf32, #tpu.memory_space<vmem>>, vector<1x1xf32>
    %20 = vector.broadcast %19 : vector<1x1xf32> to vector<8x1xf32>
    %21 = arith.addf %18, %20 : vector<8x1xf32>
    %cst_16 = arith.constant 0.000000e+00 : f32
    %22 = vector.broadcast %cst_16 : f32 to vector<8x1xf32>
    %23 = arith.subf %22, %21 : vector<8x1xf32>
    %24 = math.exp %23 : vector<8x1xf32>
    %cst_17 = arith.constant 1.000000e+00 : f32
    %25 = vector.broadcast %cst_17 : f32 to vector<8x1xf32>
    %26 = arith.addf %25, %24 : vector<8x1xf32>
    %27 = tpu.reciprocal %26 {approx = true} : vector<8x1xf32> -> vector<8x1xf32>
    %28 = arith.subf %0, %1 : vector<8x32xf32>
    %29 = vector.broadcast %27 : vector<8x1xf32> to vector<8x32xf32>
    %30 = arith.mulf %29, %28 : vector<8x32xf32>
    %31 = arith.addf %1, %30 : vector<8x32xf32>
    %32 = arith.truncf %31 : vector<8x32xf32> to vector<8x32xbf16>
    %c0_18 = arith.constant 0 : index
    %c0_19 = arith.constant 0 : index
    %33 = vector.load %arg8[%c0_18, %c0_19] : memref<32x32xbf16, #tpu.memory_space<vmem>>, vector<32x32xbf16>
    %cst_20 = arith.constant dense<0.000000e+00> : vector<8x32xf32>
    %34 = tpu.matmul %32, %33, %cst_20 {dimension_numbers = #tpu.dot_dimension_numbers<[1], [0], [0], [1], [0, 0, 1, 1], [], []>} : vector<8x32xbf16>, vector<32x32xbf16>, vector<8x32xf32> -> vector<8x32xf32>
    %c0_21 = arith.constant 0 : index
    %c0_22 = arith.constant 0 : index
    %35 = vector.load %arg9[%c0_21, %c0_22] : memref<1x32xf32, #tpu.memory_space<vmem>>, vector<1x32xf32>
    %36 = vector.broadcast %35 : vector<1x32xf32> to vector<8x32xf32>
    %37 = arith.addf %34, %36 : vector<8x32xf32>
    %cst_23 = arith.constant 0.000000e+00 : f32
    %38 = vector.broadcast %cst_23 : f32 to vector<8x32xf32>
    %39 = arith.maximumf %37, %38 : vector<8x32xf32>
    %40 = arith.truncf %39 : vector<8x32xf32> to vector<8x32xbf16>
    %c0_24 = arith.constant 0 : index
    %c0_25 = arith.constant 0 : index
    %41 = vector.load %arg10[%c0_24, %c0_25] : memref<32x32xbf16, #tpu.memory_space<vmem>>, vector<32x32xbf16>
    %cst_26 = arith.constant dense<0.000000e+00> : vector<8x32xf32>
    %42 = tpu.matmul %40, %41, %cst_26 {dimension_numbers = #tpu.dot_dimension_numbers<[1], [0], [0], [1], [0, 0, 1, 1], [], []>} : vector<8x32xbf16>, vector<32x32xbf16>, vector<8x32xf32> -> vector<8x32xf32>
    %c0_27 = arith.constant 0 : index
    %c0_28 = arith.constant 0 : index
    %43 = vector.load %arg11[%c0_27, %c0_28] : memref<1x32xf32, #tpu.memory_space<vmem>>, vector<1x32xf32>
    %44 = vector.broadcast %43 : vector<1x32xf32> to vector<8x32xf32>
    %45 = arith.addf %42, %44 : vector<8x32xf32>
    %cst_29 = arith.constant 0.000000e+00 : f32
    %46 = vector.broadcast %cst_29 : f32 to vector<8x32xf32>
    %47 = arith.maximumf %45, %46 : vector<8x32xf32>
    %48 = arith.truncf %47 : vector<8x32xf32> to vector<8x32xbf16>
    %c0_30 = arith.constant 0 : index
    %c0_31 = arith.constant 0 : index
    %49 = vector.load %arg12[%c0_30, %c0_31] : memref<32x8xbf16, #tpu.memory_space<vmem>>, vector<32x8xbf16>
    %cst_32 = arith.constant dense<0.000000e+00> : vector<8x8xf32>
    %50 = tpu.matmul %48, %49, %cst_32 {dimension_numbers = #tpu.dot_dimension_numbers<[1], [0], [0], [1], [0, 0, 1, 1], [], []>} : vector<8x32xbf16>, vector<32x8xbf16>, vector<8x8xf32> -> vector<8x8xf32>
    %c0_33 = arith.constant 0 : index
    %c0_34 = arith.constant 0 : index
    %51 = vector.load %arg13[%c0_33, %c0_34] : memref<1x8xf32, #tpu.memory_space<vmem>>, vector<1x8xf32>
    %52 = vector.broadcast %51 : vector<1x8xf32> to vector<8x8xf32>
    %53 = arith.addf %50, %52 : vector<8x8xf32>
    %c0_35 = arith.constant 0 : index
    %c0_36 = arith.constant 0 : index
    %54 = vector.load %arg14[%c0_35, %c0_36] : memref<8x8xf32, #tpu.memory_space<vmem>>, vector<8x8xf32>
    tpu.vector_store %arg14[%c0_35, %c0_36], %53 {strides = array<i32>} : memref<8x8xf32, #tpu.memory_space<vmem>>, vector<8x8xf32>,
    return
  }
  func.func @transform_0(%arg0: i32) -> (i32, i32) {
    %c0_i32 = arith.constant 0 : i32
    %c0_i32_0 = arith.constant 0 : i32
    return %arg0, %c0_i32 : i32, i32
  }
  func.func @transform_1(%arg0: i32) -> (i32, i32) {
    %c0_i32 = arith.constant 0 : i32
    %c0_i32_0 = arith.constant 0 : i32
    return %arg0, %c0_i32 : i32, i32
  }
  func.func @transform_2(%arg0: i32) -> (i32, i32) {
    %c0_i32 = arith.constant 0 : i32
    %c0_i32_0 = arith.constant 0 : i32
    %c0_i32_1 = arith.constant 0 : i32
    return %c0_i32, %c0_i32_0 : i32, i32
  }
  func.func @transform_3(%arg0: i32) -> (i32, i32) {
    %c0_i32 = arith.constant 0 : i32
    %c0_i32_0 = arith.constant 0 : i32
    %c0_i32_1 = arith.constant 0 : i32
    return %c0_i32, %c0_i32_0 : i32, i32
  }
  func.func @transform_4(%arg0: i32) -> (i32, i32) {
    %c0_i32 = arith.constant 0 : i32
    %c0_i32_0 = arith.constant 0 : i32
    %c0_i32_1 = arith.constant 0 : i32
    return %c0_i32, %c0_i32_0 : i32, i32
  }
  func.func @transform_5(%arg0: i32) -> (i32, i32) {
    %c0_i32 = arith.constant 0 : i32
    %c0_i32_0 = arith.constant 0 : i32
    %c0_i32_1 = arith.constant 0 : i32
    return %c0_i32, %c0_i32_0 : i32, i32
  }
  func.func @transform_6(%arg0: i32) -> (i32, i32) {
    %c0_i32 = arith.constant 0 : i32
    %c0_i32_0 = arith.constant 0 : i32
    %c0_i32_1 = arith.constant 0 : i32
    return %c0_i32, %c0_i32_0 : i32, i32
  }
  func.func @transform_7(%arg0: i32) -> (i32, i32) {
    %c0_i32 = arith.constant 0 : i32
    %c0_i32_0 = arith.constant 0 : i32
    %c0_i32_1 = arith.constant 0 : i32
    return %c0_i32, %c0_i32_0 : i32, i32
  }
  func.func @transform_8(%arg0: i32) -> (i32, i32) {
    %c0_i32 = arith.constant 0 : i32
    %c0_i32_0 = arith.constant 0 : i32
    %c0_i32_1 = arith.constant 0 : i32
    return %c0_i32, %c0_i32_0 : i32, i32
  }
  func.func @transform_9(%arg0: i32) -> (i32, i32) {
    %c0_i32 = arith.constant 0 : i32
    %c0_i32_0 = arith.constant 0 : i32
    %c0_i32_1 = arith.constant 0 : i32
    return %c0_i32, %c0_i32_0 : i32, i32
  }
  func.func @transform_10(%arg0: i32) -> (i32, i32) {
    %c0_i32 = arith.constant 0 : i32
    %c0_i32_0 = arith.constant 0 : i32
    %c0_i32_1 = arith.constant 0 : i32
    return %c0_i32, %c0_i32_0 : i32, i32
  }
  func.func @transform_11(%arg0: i32) -> (i32, i32) {
    %c0_i32 = arith.constant 0 : i32
    %c0_i32_0 = arith.constant 0 : i32
    %c0_i32_1 = arith.constant 0 : i32
    return %c0_i32, %c0_i32_0 : i32, i32
  }
  func.func @transform_12(%arg0: i32) -> (i32, i32) {
    %c0_i32 = arith.constant 0 : i32
    %c0_i32_0 = arith.constant 0 : i32
    %c0_i32_1 = arith.constant 0 : i32
    return %c0_i32, %c0_i32_0 : i32, i32
  }
  func.func @transform_13(%arg0: i32) -> (i32, i32) {
    %c0_i32 = arith.constant 0 : i32
    %c0_i32_0 = arith.constant 0 : i32
    return %arg0, %c0_i32 : i32, i32
  }
}

</mosaic_0001>

<llo_original>
// kernel: multimodal_transformer_head.1
$region0: #{multimodal_transformer_head.1}
  #allocation0 [shape = 'u32[]', space=smem, size = 0x4, offset = 0x4, fixed_abs, tag = 'smem constant byte address 0x4 - core index']
  #allocation1 [shape = 'u32[144,128]{1,0:T(1,128)}', space=vmem, size = 0x12000, scoped, tag = 'internal scratch']
  #allocation2 [shape = 'f32[1,1]{1,0:T(1,128)S(1)}', space=vmem, size = 0x200, scoped, tag = 'scoped memory for multimodal_transformer_head.1']
  %s0 = inlined_call_operand.hbm [shape: f32[8,32], index: 0, kind: input, shape index: {}]
  %s1 = inlined_call_operand.hbm [shape: f32[8,32], index: 1, kind: input, shape index: {}]
  %s2 = inlined_call_operand.vmem [shape: bf16[32,32], index: 2, kind: input, shape index: {}]
  %s3 = inlined_call_operand.vmem [shape: bf16[32,32], index: 3, kind: input, shape index: {}]
  %s4 = inlined_call_operand.hbm [shape: f32[1,32], index: 4, kind: input, shape index: {}]
  %s5 = inlined_call_operand.hbm [shape: f32[1,32], index: 5, kind: input, shape index: {}]
  %s6 = inlined_call_operand.<no memory space> [shape: f32[1,1], index: 6, kind: input, shape index: {}]
  %s7 = inlined_call_operand.hbm [shape: bf16[32,32], index: 7, kind: input, shape index: {}]
  %s8 = inlined_call_operand.hbm [shape: f32[1,32], index: 8, kind: input, shape index: {}]
  %s9 = inlined_call_operand.hbm [shape: bf16[32,32], index: 9, kind: input, shape index: {}]
  %s10 = inlined_call_operand.hbm [shape: f32[1,32], index: 10, kind: input, shape index: {}]
  %s11 = inlined_call_operand.vmem [shape: bf16[32,8], index: 11, kind: input, shape index: {}]
  %s12 = inlined_call_operand.hbm [shape: f32[1,8], index: 12, kind: input, shape index: {}]
  %s13 = inlined_call_operand.vmem [shape: f32[8,8], index: 13, kind: output, shape index: {}]
  %s14 = sld [smem:[#allocation0]]
  $region98: #{multimodal_transformer_head.1} parent=0
    _
  %s16 = ssub.s32 1, %s14
  %s17 = scalar_select 0, %s16, %s14
  %v18 = vstv %s6
  %19 = vst [vmem:[#allocation2] sm:$0x1] %v18
  $region1: #{multimodal_transformer_head.1} parent=0
    #allocation3 [shape = 'u8[4096]{0}', space=vmem, size = 0x1000, scoped, tag = 'input window, operand 0, single buffered']
    #allocation4 [shape = 's32[1]{0}', space=sflag, size = 0x4, scoped, tag = 'scoped memory for multimodal_transformer_head.1']
    #allocation5 [shape = 'u8[4096]{0}', space=vmem, size = 0x1000, scoped, tag = 'input window, operand 1, single buffered']
    #allocation6 [shape = 's32[1]{0}', space=sflag, size = 0x4, scoped, tag = 'scoped memory for multimodal_transformer_head.1']
    #allocation7 [shape = 'u8[512]{0}', space=vmem, size = 0x400, scoped, tag = 'input window, operand 4, single buffered']
    #allocation8 [shape = 'u8[512]{0}', space=vmem, size = 0x400, scoped, tag = 'input window, operand 5, single buffered']
    #allocation9 [shape = 's32[1]{0}', space=sflag, size = 0x4, scoped, tag = 'scoped memory for multimodal_transformer_head.1']
    #allocation10 [shape = 'u8[8192]{0}', space=vmem, size = 0x2000, scoped, tag = 'input window, operand 7, single buffered']
    #allocation11 [shape = 'u8[512]{0}', space=vmem, size = 0x400, scoped, tag = 'input window, operand 8, single buffered']
    #allocation12 [shape = 's32[1]{0}', space=sflag, size = 0x4, scoped, tag = 'scoped memory for multimodal_transformer_head.1']
    #allocation13 [shape = 'u8[8192]{0}', space=vmem, size = 0x2000, scoped, tag = 'input window, operand 9, single buffered']
    #allocation14 [shape = 'u8[512]{0}', space=vmem, size = 0x400, scoped, tag = 'input window, operand 10, single buffered']
    #allocation15 [shape = 's32[1]{0}', space=sflag, size = 0x4, scoped, tag = 'scoped memory for multimodal_transformer_head.1']
    #allocation16 [shape = 'u8[512]{0}', space=vmem, size = 0x400, scoped, tag = 'input window, operand 12, single buffered']
    %20 = vsyncpa [#allocation4], 0
    %21 = vsyncpa [#allocation6], 0
    %22 = vsyncpa [#allocation9], 0
    %23 = vsyncpa [#allocation12], 0
    %24 = vsyncpa [#allocation15], 0
    // Predicated region
    $region2: #{multimodal_transformer_head.1} parent=1 // pred_check
      _
    $region3: #{multimodal_transformer_head.1} parent=1 // pred_check_branch
      %26 = sbr.rel (0) target = $region5
    $region4: #{multimodal_transformer_head.1} parent=1 // pred_region
      %s28 = ssub.s32 128, 128
      %29 = vsyncadd [#allocation4], %s28
      %s31 = sshll.u32 [#allocation3], 4
      %s32 = int_to_ptr.vmem [resolvable:$true] %s31
      %34 = dma.hbm_to_vmem [thread:$0]  %s0, 128, %s32, [#allocation4]
    $region5: #{multimodal_transformer_head.1} parent=1 // pred_fallthru
      _
    // Predicated region
    $region6: #{multimodal_transformer_head.1} parent=1 // pred_check
      _
    $region7: #{multimodal_transformer_head.1} parent=1 // pred_check_branch
      %36 = sbr.rel (0) target = $region9
    $region8: #{multimodal_transformer_head.1} parent=1 // pred_region
      %s38 = ssub.s32 128, 128
      %39 = vsyncadd [#allocation6], %s38
      %s41 = sshll.u32 [#allocation5], 4
      %s42 = int_to_ptr.vmem [resolvable:$true] %s41
      %44 = dma.hbm_to_vmem [thread:$0]  %s1, 128, %s42, [#allocation6]
    $region9: #{multimodal_transformer_head.1} parent=1 // pred_fallthru
      _
    // Predicated region
    $region10: #{multimodal_transformer_head.1} parent=1 // pred_check
      _
    $region11: #{multimodal_transformer_head.1} parent=1 // pred_check_branch
      %46 = sbr.rel (0) target = $region13
    $region12: #{multimodal_transformer_head.1} parent=1 // pred_region
      _
    $region13: #{multimodal_transformer_head.1} parent=1 // pred_fallthru
      _
    // Predicated region
    $region14: #{multimodal_transformer_head.1} parent=1 // pred_check
      _
    $region15: #{multimodal_transformer_head.1} parent=1 // pred_check_branch
      %48 = sbr.rel (0) target = $region17
    $region16: #{multimodal_transformer_head.1} parent=1 // pred_region
      _
    $region17: #{multimodal_transformer_head.1} parent=1 // pred_fallthru
      _
    // Predicated region
    $region18: #{multimodal_transformer_head.1} parent=1 // pred_check
      _
    $region19: #{multimodal_transformer_head.1} parent=1 // pred_check_branch
      %50 = sbr.rel (0) target = $region21
    $region20: #{multimodal_transformer_head.1} parent=1 // pred_region
      %s52 = ssub.s32 16, 16
      %53 = vsyncadd [#allocation6], %s52
      %s55 = sshll.u32 [#allocation7], 4
      %s56 = int_to_ptr.vmem [resolvable:$true] %s55
      %58 = dma.hbm_to_vmem [thread:$0]  %s4, 16, %s56, [#allocation6]
    $region21: #{multimodal_transformer_head.1} parent=1 // pred_fallthru
      _
    // Predicated region
    $region22: #{multimodal_transformer_head.1} parent=1 // pred_check
      _
    $region23: #{multimodal_transformer_head.1} parent=1 // pred_check_branch
      %60 = sbr.rel (0) target = $region25
    $region24: #{multimodal_transformer_head.1} parent=1 // pred_region
      %s62 = ssub.s32 16, 16
      %63 = vsyncadd [#allocation9], %s62
      %s65 = sshll.u32 [#allocation8], 4
      %s66 = int_to_ptr.vmem [resolvable:$true] %s65
      %68 = dma.hbm_to_vmem [thread:$0]  %s5, 16, %s66, [#allocation9]
    $region25: #{multimodal_transformer_head.1} parent=1 // pred_fallthru
      _
    // Predicated region
    $region26: #{multimodal_transformer_head.1} parent=1 // pred_check
      _
    $region27: #{multimodal_transformer_head.1} parent=1 // pred_check_branch
      %70 = sbr.rel (0) target = $region29
    $region28: #{multimodal_transformer_head.1} parent=1 // pred_region
      _
    $region29: #{multimodal_transformer_head.1} parent=1 // pred_fallthru
      _
    // Predicated region
    $region30: #{multimodal_transformer_head.1} parent=1 // pred_check
      _
    $region31: #{multimodal_transformer_head.1} parent=1 // pred_check_branch
      %72 = sbr.rel (0) target = $region33
    $region32: #{multimodal_transformer_head.1} parent=1 // pred_region
      %s74 = ssub.s32 256, 256
      %75 = vsyncadd [#allocation9], %s74
      %s76 = sshll.u32 [#allocation10], 4
      %s77 = int_to_ptr.vmem [resolvable:$true] %s76
      %82 = dma.hbm_to_vmem [thread:$0]  %s7, 256, %s77, [#allocation9], 64, 64, 4
    $region33: #{multimodal_transformer_head.1} parent=1 // pred_fallthru
      _
    // Predicated region
    $region34: #{multimodal_transformer_head.1} parent=1 // pred_check
      _
    $region35: #{multimodal_transformer_head.1} parent=1 // pred_check_branch
      %84 = sbr.rel (0) target = $region37
    $region36: #{multimodal_transformer_head.1} parent=1 // pred_region
      %s86 = ssub.s32 16, 16
      %87 = vsyncadd [#allocation12], %s86
      %s89 = sshll.u32 [#allocation11], 4
      %s90 = int_to_ptr.vmem [resolvable:$true] %s89
      %92 = dma.hbm_to_vmem [thread:$0]  %s8, 16, %s90, [#allocation12]
    $region37: #{multimodal_transformer_head.1} parent=1 // pred_fallthru
      _
    // Predicated region
    $region38: #{multimodal_transformer_head.1} parent=1 // pred_check
      _
    $region39: #{multimodal_transformer_head.1} parent=1 // pred_check_branch
      %94 = sbr.rel (0) target = $region41
    $region40: #{multimodal_transformer_head.1} parent=1 // pred_region
      %s96 = ssub.s32 256, 256
      %97 = vsyncadd [#allocation12], %s96
      %s98 = sshll.u32 [#allocation13], 4
      %s99 = int_to_ptr.vmem [resolvable:$true] %s98
      %104 = dma.hbm_to_vmem [thread:$0]  %s9, 256, %s99, [#allocation12], 64, 64, 4
    $region41: #{multimodal_transformer_head.1} parent=1 // pred_fallthru
      _
    // Predicated region
    $region42: #{multimodal_transformer_head.1} parent=1 // pred_check
      _
    $region43: #{multimodal_transformer_head.1} parent=1 // pred_check_branch
      %106 = sbr.rel (0) target = $region45
    $region44: #{multimodal_transformer_head.1} parent=1 // pred_region
      %s108 = ssub.s32 16, 16
      %109 = vsyncadd [#allocation15], %s108
      %s111 = sshll.u32 [#allocation14], 4
      %s112 = int_to_ptr.vmem [resolvable:$true] %s111
      %114 = dma.hbm_to_vmem [thread:$0]  %s10, 16, %s112, [#allocation15]
    $region45: #{multimodal_transformer_head.1} parent=1 // pred_fallthru
      _
    // Predicated region
    $region46: #{multimodal_transformer_head.1} parent=1 // pred_check
      _
    $region47: #{multimodal_transformer_head.1} parent=1 // pred_check_branch
      %116 = sbr.rel (0) target = $region49
    $region48: #{multimodal_transformer_head.1} parent=1 // pred_region
      _
    $region49: #{multimodal_transformer_head.1} parent=1 // pred_fallthru
      _
    // Predicated region
    $region50: #{multimodal_transformer_head.1} parent=1 // pred_check
      _
    $region51: #{multimodal_transformer_head.1} parent=1 // pred_check_branch
      %118 = sbr.rel (0) target = $region53
    $region52: #{multimodal_transformer_head.1} parent=1 // pred_region
      %s120 = ssub.s32 16, 16
      %121 = vsyncadd [#allocation15], %s120
      %s123 = sshll.u32 [#allocation16], 4
      %s124 = int_to_ptr.vmem [resolvable:$true] %s123
      %126 = dma.hbm_to_vmem [thread:$0]  %s12, 16, %s124, [#allocation15]
    $region53: #{multimodal_transformer_head.1} parent=1 // pred_fallthru
      _
    // Predicated region
    $region54: #{multimodal_transformer_head.1} parent=1 // pred_check
      _
    $region55: #{multimodal_transformer_head.1} parent=1 // pred_check_branch
      %128 = sbr.rel (0) target = $region57
    $region56: #{multimodal_transformer_head.1} parent=1 // pred_region
      %129 = dma.done [#allocation4], 128
    $region57: #{multimodal_transformer_head.1} parent=1 // pred_fallthru
      _
    // Predicated region
    $region58: #{multimodal_transformer_head.1} parent=1 // pred_check
      _
    $region59: #{multimodal_transformer_head.1} parent=1 // pred_check_branch
      %131 = sbr.rel (0) target = $region61
    $region60: #{multimodal_transformer_head.1} parent=1 // pred_region
      %132 = dma.done [#allocation6], 128
    $region61: #{multimodal_transformer_head.1} parent=1 // pred_fallthru
      _
    // Predicated region
    $region62: #{multimodal_transformer_head.1} parent=1 // pred_check
      _
    $region63: #{multimodal_transformer_head.1} parent=1 // pred_check_branch
      %134 = sbr.rel (0) target = $region65
    $region64: #{multimodal_transformer_head.1} parent=1 // pred_region
      %135 = dma.done [#allocation6], 16
    $region65: #{multimodal_transformer_head.1} parent=1 // pred_fallthru
      _
    // Predicated region
    $region66: #{multimodal_transformer_head.1} parent=1 // pred_check
      _
    $region67: #{multimodal_transformer_head.1} parent=1 // pred_check_branch
      %137 = sbr.rel (0) target = $region69
    $region68: #{multimodal_transformer_head.1} parent=1 // pred_region
      %138 = dma.done [#allocation9], 16
    $region69: #{multimodal_transformer_head.1} parent=1 // pred_fallthru
      _
    // Predicated region
    $region70: #{multimodal_transformer_head.1} parent=1 // pred_check
      _
    $region71: #{multimodal_transformer_head.1} parent=1 // pred_check_branch
      %140 = sbr.rel (0) target = $region73
    $region72: #{multimodal_transformer_head.1} parent=1 // pred_region
      %141 = dma.done [#allocation9], 256
    $region73: #{multimodal_transformer_head.1} parent=1 // pred_fallthru
      _
    // Predicated region
    $region74: #{multimodal_transformer_head.1} parent=1 // pred_check
      _
    $region75: #{multimodal_transformer_head.1} parent=1 // pred_check_branch
      %143 = sbr.rel (0) target = $region77
    $region76: #{multimodal_transformer_head.1} parent=1 // pred_region
      %144 = dma.done [#allocation12], 16
    $region77: #{multimodal_transformer_head.1} parent=1 // pred_fallthru
      _
    // Predicated region
    $region78: #{multimodal_transformer_head.1} parent=1 // pred_check
      _
    $region79: #{multimodal_transformer_head.1} parent=1 // pred_check_branch
      %146 = sbr.rel (0) target = $region81
    $region80: #{multimodal_transformer_head.1} parent=1 // pred_region
      %147 = dma.done [#allocation12], 256
    $region81: #{multimodal_transformer_head.1} parent=1 // pred_fallthru
      _
    // Predicated region
    $region82: #{multimodal_transformer_head.1} parent=1 // pred_check
      _
    $region83: #{multimodal_transformer_head.1} parent=1 // pred_check_branch
      %149 = sbr.rel (0) target = $region85
    $region84: #{multimodal_transformer_head.1} parent=1 // pred_region
      %150 = dma.done [#allocation15], 16
    $region85: #{multimodal_transformer_head.1} parent=1 // pred_fallthru
      _
    // Predicated region
    $region86: #{multimodal_transformer_head.1} parent=1 // pred_check
      _
    $region87: #{multimodal_transformer_head.1} parent=1 // pred_check_branch
      %152 = sbr.rel (0) target = $region89
    $region88: #{multimodal_transformer_head.1} parent=1 // pred_region
      %153 = dma.done [#allocation15], 16
    $region89: #{multimodal_transformer_head.1} parent=1 // pred_fallthru
      _
    %v155 = vld [vmem:[#allocation3] sm:$0xff]
    %v156 = vld [vmem:[#allocation5] sm:$0xff]
    %v157 = vpack.c.bf16 %v155, %v155
    %v158 = vld [vmem:[%s2] sm:$0xf]
    %v159 = vld [vmem:[%s2 + $0x4] sm:$0xf]
    %v160 = vld [vmem:[%s2 + $0x8] sm:$0xf]
    %v161 = vld [vmem:[%s2 + $0xc] sm:$0xf]
    %v162 = vpack.c.bf16 %v156, %v156
    %v163 = vld [vmem:[%s3] sm:$0xf]
    %v164 = vld [vmem:[%s3 + $0x4] sm:$0xf]
    %v165 = vld [vmem:[%s3 + $0x8] sm:$0xf]
    %v166 = vld [vmem:[%s3 + $0xc] sm:$0xf]
    %v171 = vunpack.c.l.b16 %v163
    %v172 = vunpack.c.l.b16 %v164
    %v173 = vunpack.c.l.b16 %v165
    %v174 = vunpack.c.l.b16 %v166
    %v175 = vpack.c.b16 %v172, %v171
    %v176 = vpack.c.b16 %v174, %v173
    %vm179 = vcmask 261120
    %v181 = vsel %vm179, %v162, 0
    %183 = vmatprep.subr.bf16.mxu0 0
    %184 = vmatpush1.bf16.msra.mxu0 0
    %185 = vmatprep.subr.bf16.mxu0 0
    %186 = vmatpush1.bf16.msra.mxu0 0
    %187 = vmatprep.subr.bf16.mxu0 0
    %188 = vmatpush1.bf16.msra.mxu0 0
    %189 = vmatprep.subr.bf16.mxu0 0
    %190 = vmatpush1.bf16.msra.mxu0 0
    %191 = vmatprep.subr.bf16.mxu0 0
    %192 = vmatpush1.bf16.msra.mxu0 0
    %193 = vmatprep.subr.bf16.mxu0 0
    %194 = vmatpush1.bf16.msra.mxu0 0
    %195 = vmatprep.subr.bf16.mxu0 0
    %196 = vmatpush1.bf16.msra.mxu0 %v176
    %197 = vmatprep.subr.bf16.mxu0 0
    %198 = vmatpush1.bf16.msra.mxu0 %v175
    %199 = vmatprep.subr.bf16.mxu0 0
    %200 = vmatpush2.bf16.msra.mxu0 0
    %201 = vmatprep.subr.bf16.mxu0 0
    %202 = vmatpush2.bf16.msra.mxu0 0
    %203 = vmatprep.subr.bf16.mxu0 0
    %204 = vmatpush2.bf16.msra.mxu0 0
    %205 = vmatprep.subr.bf16.mxu0 0
    %206 = vmatpush2.bf16.msra.mxu0 0
    %207 = vmatprep.subr.bf16.mxu0 0
    %208 = vmatpush2.bf16.msra.mxu0 0
    %209 = vmatprep.subr.bf16.mxu0 0
    %210 = vmatpush2.bf16.msra.mxu0 0
    %211 = vmatprep.subr.bf16.mxu0 0
    %212 = vmatpush2.bf16.msra.mxu0 0
    %213 = vmatprep.subr.bf16.mxu0 0
    %214 = vmatpush2.bf16.msra.mxu0 0
    %215 = vmatprep.mubr.bf16.mxu0 0
    %216 = vmatmul.mubr.bf16.gmra.mxu0 %v181
    %v217 = vpop.f32.mrf.mxu0
    %v218 = vadd.f32 0.0, %v217
    %v219 = vpop.f32.mrf.mxu0
    %v220 = vpop.f32.mrf.mxu0
    %v221 = vpop.f32.mrf.mxu0
    %222 = vdwg.mxu0
    %v227 = vunpack.c.l.b16 %v158
    %v228 = vunpack.c.l.b16 %v159
    %v229 = vunpack.c.l.b16 %v160
    %v230 = vunpack.c.l.b16 %v161
    %v231 = vpack.c.b16 %v228, %v227
    %v232 = vpack.c.b16 %v230, %v229
    %v236 = vsel %vm179, %v157, 0
    %238 = vmatprep.subr.bf16.mxu0 0
    %239 = vmatpush1.bf16.msra.mxu0 0
    %240 = vmatprep.subr.bf16.mxu0 0
    %241 = vmatpush1.bf16.msra.mxu0 0
    %242 = vmatprep.subr.bf16.mxu0 0
    %243 = vmatpush1.bf16.msra.mxu0 0
    %244 = vmatprep.subr.bf16.mxu0 0
    %245 = vmatpush1.bf16.msra.mxu0 0
    %246 = vmatprep.subr.bf16.mxu0 0
    %247 = vmatpush1.bf16.msra.mxu0 0
    %248 = vmatprep.subr.bf16.mxu0 0
    %249 = vmatpush1.bf16.msra.mxu0 0
    %250 = vmatprep.subr.bf16.mxu0 0
    %251 = vmatpush1.bf16.msra.mxu0 %v232
    %252 = vmatprep.subr.bf16.mxu0 0
    %253 = vmatpush1.bf16.msra.mxu0 %v231
    %254 = vmatprep.subr.bf16.mxu0 0
    %255 = vmatpush2.bf16.msra.mxu0 0
    %256 = vmatprep.subr.bf16.mxu0 0
    %257 = vmatpush2.bf16.msra.mxu0 0
    %258 = vmatprep.subr.bf16.mxu0 0
    %259 = vmatpush2.bf16.msra.mxu0 0
    %260 = vmatprep.subr.bf16.mxu0 0
    %261 = vmatpush2.bf16.msra.mxu0 0
    %262 = vmatprep.subr.bf16.mxu0 0
    %263 = vmatpush2.bf16.msra.mxu0 0
    %264 = vmatprep.subr.bf16.mxu0 0
    %265 = vmatpush2.bf16.msra.mxu0 0
    %266 = vmatprep.subr.bf16.mxu0 0
    %267 = vmatpush2.bf16.msra.mxu0 0
    %268 = vmatprep.subr.bf16.mxu0 0
    %269 = vmatpush2.bf16.msra.mxu0 0
    %270 = vmatprep.mubr.bf16.mxu0 0
    %271 = vmatmul.mubr.bf16.gmra.mxu0 %v236
    %v272 = vpop.f32.mrf.mxu0
    %v273 = vadd.f32 %v218, %v272
    %v274 = vpop.f32.mrf.mxu0
    %v275 = vpop.f32.mrf.mxu0
    %v276 = vpop.f32.mrf.mxu0
    %277 = vdwg.mxu0
    %v278 = vld [vmem:[#allocation7] sm:$0x1]
    %v280 = vlaneseq
    %v281 = vshrl.u32 %v280, 7
    %v282 = vsub.s32 0, %v281
    %v283 = vrot.slane %v278, %v282
    %v285 = vadd.f32 %v273, %v283
    %v286 = vmax.f32 %v285, 0.0
    %v287 = vld [vmem:[#allocation8] sm:$0x1]
    %v289 = vlaneseq
    %v290 = vshrl.u32 %v289, 7
    %v291 = vsub.s32 0, %v290
    %v292 = vrot.slane %v287, %v291
    %v294 = vmul.f32 %v286, %v292
    %v295 = vsel %vm179, %v294, 0.0
    %296 = vadd.xlane.f32.xlu0 %v295
    %v297 = vpop.xlane.xlu0 %296
    %v298 = vld [vmem:[#allocation2] sm:$0x1]
    %v300 = vlaneseq
    %v301 = vshrl.u32 %v300, 7
    %v302 = vsub.s32 0, %v301
    %v303 = vrot.slane %v298, %v302
    %v305 = vadd.f32 %v297, %v303
    %v306 = vsub.f32 0.0, %v305
    %v307 = vmul.f32 %v306, 1.442695
    %v308 = vpow.pop %v307
    %v309 = vadd.f32 %v308, 1.0
    %v310 = vrcp.pop %v309
    %v311 = vsub.f32 %v155, %v156
    %313 = vset.pattern.permute.xlu0 0
    %314 = vperm.xlu0 %313, %v310
    %v315 = vpop.permute.xlu0 %314
    %v317 = vmul.f32 %v315, %v311
    %v318 = vadd.f32 %v156, %v317
    %v319 = vpack.c.bf16 %v318, %v318
    %v320 = vld [vmem:[#allocation10] sm:$0xf]
    %v321 = vld [vmem:[#allocation10 + $0x4] sm:$0xf]
    %v322 = vld [vmem:[#allocation10 + $0x8] sm:$0xf]
    %v323 = vld [vmem:[#allocation10 + $0xc] sm:$0xf]
    %v324 = vld [vmem:[#allocation11] sm:$0x1]
    %v326 = vlaneseq
    %v327 = vshrl.u32 %v326, 7
    %v328 = vsub.s32 0, %v327
    %v329 = vrot.slane %v324, %v328
    %v335 = vunpack.c.l.b16 %v320
    %v336 = vunpack.c.l.b16 %v321
    %v337 = vunpack.c.l.b16 %v322
    %v338 = vunpack.c.l.b16 %v323
    %v339 = vpack.c.b16 %v336, %v335
    %v340 = vpack.c.b16 %v338, %v337
    %v344 = vsel %vm179, %v319, 0
    %346 = vmatprep.subr.bf16.mxu0 0
    %347 = vmatpush1.bf16.msra.mxu0 0
    %348 = vmatprep.subr.bf16.mxu0 0
    %349 = vmatpush1.bf16.msra.mxu0 0
    %350 = vmatprep.subr.bf16.mxu0 0
    %351 = vmatpush1.bf16.msra.mxu0 0
    %352 = vmatprep.subr.bf16.mxu0 0
    %353 = vmatpush1.bf16.msra.mxu0 0
    %354 = vmatprep.subr.bf16.mxu0 0
    %355 = vmatpush1.bf16.msra.mxu0 0
    %356 = vmatprep.subr.bf16.mxu0 0
    %357 = vmatpush1.bf16.msra.mxu0 0
    %358 = vmatprep.subr.bf16.mxu0 0
    %359 = vmatpush1.bf16.msra.mxu0 %v340
    %360 = vmatprep.subr.bf16.mxu0 0
    %361 = vmatpush1.bf16.msra.mxu0 %v339
    %362 = vmatprep.subr.bf16.mxu0 0
    %363 = vmatpush2.bf16.msra.mxu0 0
    %364 = vmatprep.subr.bf16.mxu0 0
    %365 = vmatpush2.bf16.msra.mxu0 0
    %366 = vmatprep.subr.bf16.mxu0 0
    %367 = vmatpush2.bf16.msra.mxu0 0
    %368 = vmatprep.subr.bf16.mxu0 0
    %369 = vmatpush2.bf16.msra.mxu0 0
    %370 = vmatprep.subr.bf16.mxu0 0
    %371 = vmatpush2.bf16.msra.mxu0 0
    %372 = vmatprep.subr.bf16.mxu0 0
    %373 = vmatpush2.bf16.msra.mxu0 0
    %374 = vmatprep.subr.bf16.mxu0 0
    %375 = vmatpush2.bf16.msra.mxu0 0
    %376 = vmatprep.subr.bf16.mxu0 0
    %377 = vmatpush2.bf16.msra.mxu0 0
    %378 = vmatprep.mubr.bf16.mxu0 0
    %379 = vmatmul.mubr.bf16.gmra.mxu0 %v344
    %v380 = vpop.f32.mrf.mxu0
    %v381 = vadd.f32 %v329, %v380
    %v382 = vpop.f32.mrf.mxu0
    %v383 = vpop.f32.mrf.mxu0
    %v384 = vpop.f32.mrf.mxu0
    %385 = vdwg.mxu0
    %v386 = vmax.f32 %v381, 0.0
    %v387 = vpack.c.bf16 %v386, %v386
    %v388 = vld [vmem:[#allocation13] sm:$0xf]
    %v389 = vld [vmem:[#allocation13 + $0x4] sm:$0xf]
    %v390 = vld [vmem:[#allocation13 + $0x8] sm:$0xf]
    %v391 = vld [vmem:[#allocation13 + $0xc] sm:$0xf]
    %v392 = vld [vmem:[#allocation14] sm:$0x1]
    %v394 = vlaneseq
    %v395 = vshrl.u32 %v394, 7
    %v396 = vsub.s32 0, %v395
    %v397 = vrot.slane %v392, %v396
    %v403 = vunpack.c.l.b16 %v388
    %v404 = vunpack.c.l.b16 %v389
    %v405 = vunpack.c.l.b16 %v390
    %v406 = vunpack.c.l.b16 %v391
    %v407 = vpack.c.b16 %v404, %v403
    %v408 = vpack.c.b16 %v406, %v405
    %v412 = vsel %vm179, %v387, 0
    %414 = vmatprep.subr.bf16.mxu0 0
    %415 = vmatpush1.bf16.msra.mxu0 0
    %416 = vmatprep.subr.bf16.mxu0 0
    %417 = vmatpush1.bf16.msra.mxu0 0
    %418 = vmatprep.subr.bf16.mxu0 0
    %419 = vmatpush1.bf16.msra.mxu0 0
    %420 = vmatprep.subr.bf16.mxu0 0
    %421 = vmatpush1.bf16.msra.mxu0 0
    %422 = vmatprep.subr.bf16.mxu0 0
    %423 = vmatpush1.bf16.msra.mxu0 0
    %424 = vmatprep.subr.bf16.mxu0 0
    %425 = vmatpush1.bf16.msra.mxu0 0
    %426 = vmatprep.subr.bf16.mxu0 0
    %427 = vmatpush1.bf16.msra.mxu0 %v408
    %428 = vmatprep.subr.bf16.mxu0 0
    %429 = vmatpush1.bf16.msra.mxu0 %v407
    %430 = vmatprep.subr.bf16.mxu0 0
    %431 = vmatpush2.bf16.msra.mxu0 0
    %432 = vmatprep.subr.bf16.mxu0 0
    %433 = vmatpush2.bf16.msra.mxu0 0
    %434 = vmatprep.subr.bf16.mxu0 0
    %435 = vmatpush2.bf16.msra.mxu0 0
    %436 = vmatprep.subr.bf16.mxu0 0
    %437 = vmatpush2.bf16.msra.mxu0 0
    %438 = vmatprep.subr.bf16.mxu0 0
    %439 = vmatpush2.bf16.msra.mxu0 0
    %440 = vmatprep.subr.bf16.mxu0 0
    %441 = vmatpush2.bf16.msra.mxu0 0
    %442 = vmatprep.subr.bf16.mxu0 0
    %443 = vmatpush2.bf16.msra.mxu0 0
    %444 = vmatprep.subr.bf16.mxu0 0
    %445 = vmatpush2.bf16.msra.mxu0 0
    %446 = vmatprep.mubr.bf16.mxu0 0
    %447 = vmatmul.mubr.bf16.gmra.mxu0 %v412
    %v448 = vpop.f32.mrf.mxu0
    %v449 = vadd.f32 %v397, %v448
    %v450 = vpop.f32.mrf.mxu0
    %v451 = vpop.f32.mrf.mxu0
    %v452 = vpop.f32.mrf.mxu0
    %453 = vdwg.mxu0
    %v454 = vmax.f32 %v449, 0.0
    %v455 = vpack.c.bf16 %v454, %v454
    %v456 = vld [vmem:[%s11] sm:$0xf]
    %v457 = vld [vmem:[%s11 + $0x4] sm:$0xf]
    %v458 = vld [vmem:[%s11 + $0x8] sm:$0xf]
    %v459 = vld [vmem:[%s11 + $0xc] sm:$0xf]
    %v460 = vld [vmem:[#allocation16] sm:$0x1]
    %v462 = vlaneseq
    %v463 = vshrl.u32 %v462, 7
    %v464 = vsub.s32 0, %v463
    %v465 = vrot.slane %v460, %v464
    %v471 = vunpack.c.l.b16 %v456
    %v472 = vunpack.c.l.b16 %v457
    %v473 = vunpack.c.l.b16 %v458
    %v474 = vunpack.c.l.b16 %v459
    %v475 = vpack.c.b16 %v472, %v471
    %v476 = vpack.c.b16 %v474, %v473
    %v480 = vsel %vm179, %v455, 0
    %482 = vmatprep.subr.bf16.mxu0 0
    %483 = vmatpush1.bf16.msra.mxu0 0
    %484 = vmatprep.subr.bf16.mxu0 0
    %485 = vmatpush1.bf16.msra.mxu0 0
    %486 = vmatprep.subr.bf16.mxu0 0
    %487 = vmatpush1.bf16.msra.mxu0 0
    %488 = vmatprep.subr.bf16.mxu0 0
    %489 = vmatpush1.bf16.msra.mxu0 0
    %490 = vmatprep.subr.bf16.mxu0 0
    %491 = vmatpush1.bf16.msra.mxu0 0
    %492 = vmatprep.subr.bf16.mxu0 0
    %493 = vmatpush1.bf16.msra.mxu0 0
    %494 = vmatprep.subr.bf16.mxu0 0
    %495 = vmatpush1.bf16.msra.mxu0 %v476
    %496 = vmatprep.subr.bf16.mxu0 0
    %497 = vmatpush1.bf16.msra.mxu0 %v475
    %498 = vmatprep.subr.bf16.mxu0 0
    %499 = vmatpush2.bf16.msra.mxu0 0
    %500 = vmatprep.subr.bf16.mxu0 0
    %501 = vmatpush2.bf16.msra.mxu0 0
    %502 = vmatprep.subr.bf16.mxu0 0
    %503 = vmatpush2.bf16.msra.mxu0 0
    %504 = vmatprep.subr.bf16.mxu0 0
    %505 = vmatpush2.bf16.msra.mxu0 0
    %506 = vmatprep.subr.bf16.mxu0 0
    %507 = vmatpush2.bf16.msra.mxu0 0
    %508 = vmatprep.subr.bf16.mxu0 0
    %509 = vmatpush2.bf16.msra.mxu0 0
    %510 = vmatprep.subr.bf16.mxu0 0
    %511 = vmatpush2.bf16.msra.mxu0 0
    %512 = vmatprep.subr.bf16.mxu0 0
    %513 = vmatpush2.bf16.msra.mxu0 0
    %514 = vmatprep.mubr.bf16.mxu0 0
    %515 = vmatmul.mubr.bf16.gmra.mxu0 %v480
    %v516 = vpop.f32.mrf.mxu0
    %v517 = vadd.f32 %v465, %v516
    %v518 = vpop.f32.mrf.mxu0
    %v519 = vpop.f32.mrf.mxu0
    %v520 = vpop.f32.mrf.mxu0
    %521 = vdwg.mxu0
    %vm522 = vcmask 64512
    %523 = vst.msk [vmem:[%s13] sm:$0xff] %vm522, %v517
    // Predicated region
    $region90: #{multimodal_transformer_head.1} parent=1 // pred_check
      _
    $region91: #{multimodal_transformer_head.1} parent=1 // pred_check_branch
      %525 = sbr.rel (0) target = $region93
    $region92: #{multimodal_transformer_head.1} parent=1 // pred_region
      _
    $region93: #{multimodal_transformer_head.1} parent=1 // pred_fallthru
      _
    // Predicated region
    $region94: #{multimodal_transformer_head.1} parent=1 // pred_check
      _
    $region95: #{multimodal_transformer_head.1} parent=1 // pred_check_branch
      %527 = sbr.rel (0) target = $region97
    $region96: #{multimodal_transformer_head.1} parent=1 // pred_region
      _
    $region97: #{multimodal_transformer_head.1} parent=1 // pred_fallthru
      _
    %528 = vsyncpa [#allocation4], 1
    %529 = vsyncpa [#allocation6], 1
    %530 = vsyncpa [#allocation9], 1
    %531 = vsyncpa [#allocation12], 1
    %532 = vsyncpa [#allocation15], 1

</llo_original>
